<compile_context>
chip_gen: v6e
topology: v6e:2x2x1
jax: 0.10.0
libtpu: 0.0.40
codegen_flags: <defaults>
</compile_context>

<pallas_src>
import functools
import math

import jax
import jax.numpy as jnp
from jax import lax
from jax.experimental import pallas as pl
from jax.experimental.pallas import tpu as pltpu

_LN2 = math.log(2.0)
_SEVEN_LN2 = 7.0 * _LN2              # fold *7 and *ln2 into one multiply
_INV_SEVEN_LN2 = 1.0 / (7.0 * _LN2)  # fold /ln2 and /7 into one multiply


def _round_up(n, m):
    return ((n + m - 1) // m) * m


def _lane_fold_group(c_in, c_out):
    """Smallest G with 128 | G*c_in and 128 | G*c_out (lane-dense in AND out)."""
    g_in = 128 // math.gcd(128, c_in)
    g_out = 128 // math.gcd(128, c_out)
    return g_in * g_out // math.gcd(g_in, g_out)


def _choose_tile(rows_g, l_in, l_out, row_tile):
    """Row-tile of folded rows: multiple of 8, >=2 grid steps when possible,
    and comfortably inside v7x's 64 MiB VMEM (incl. f32 temporaries)."""
    if rows_g <= 8:
        return rows_g                       # single block equal to full dim

    def vmem_needed(t):
        io = 2 * t * (l_in + l_out) * 4      # double-buffered in/out tiles
        temps = 2 * t * (l_in + l_out) * 4   # widened x, y, z, out temporaries
        return io + temps + l_in * l_out * 4

    tile = max(8, min(row_tile, _round_up(-(-rows_g // 2), 8)))
    while tile > 8 and vmem_needed(tile) > (44 << 20):
        tile = max(8, _round_up(tile // 2, 8))
    return tile


def _reconstructor_kernel(x_ref, f_ref, o_ref, *, precision):
    # x_ref: (tile, G*C)   lane-folded tile of the flattened (B*H*W, C) input
    # f_ref: (G*C, G*Cout) block-diagonal kron(I_G, factor), resident each step
    x = x_ref[...].astype(jnp.float32)

    # 2 ** (clip(x + 1, min=0) * 7) - 1        (constants folded, EUP exp)
    y = jnp.exp(jnp.maximum(x + 1.0, 0.0) * _SEVEN_LN2) - 1.0

    # per-channel-group matmul with `factor` via the block-diagonal operand (MXU)
    z = jnp.dot(y, f_ref[...], preferred_element_type=jnp.float32,
                precision=precision)

    # log2(clip(z + 1, min=1)) / 7 - 1         (constants folded, EUP log)
    out = jnp.log(jnp.maximum(z + 1.0, 1.0)) * _INV_SEVEN_LN2 - 1.0

    o_ref[...] = out.astype(o_ref.dtype)


def _reconstructor_impl(x_nchw, factor_bd, c_in, c_out, group,
                        *, row_tile, precision):
    B, C, H, W = x_nchw.shape
    assert C == c_in
    rows = B * H * W

    # torch: x.view(B, H, W, C) -- pure reshape of NCHW memory.  Work on the
    # flattened (rows, C) matrix; do NOT transpose.
    x_mat = x_nchw.reshape(rows, C)

    # Lane fold.  Common case rows % G == 0: zero extra HBM traffic (no pad,
    # no output slice).  Rare ragged case: pad only the <= G-1 tail C-vectors.
    rem = rows % group
    if rem:
        x_mat = jnp.pad(x_mat, ((0, group - rem), (0, 0)))
    rows_g = x_mat.shape[0] // group
    l_in, l_out = group * c_in, group * c_out
    x_folded = x_mat.reshape(rows_g, l_in)

    tile = _choose_tile(rows_g, l_in, l_out, row_tile)
    grid = (pl.cdiv(rows_g, tile),)          # ragged final block is masked

    # Accurate, memory-bound cost hint (the block-diagonal matmul actually
    # executed has K = l_in, N = l_out).
    cost = pl.CostEstimate(
        flops=2 * rows_g * l_in * l_out + 6 * rows_g * (l_in + l_out),
        transcendentals=rows_g * (l_in + l_out),
        bytes_accessed=rows_g * (l_in + l_out) * 4 + l_in * l_out * 4,
    )

    needed = 4 * tile * (l_in + l_out) * 4 + l_in * l_out * 4
    vmem_limit = int(min(48 << 20, max(16 << 20, needed + (4 << 20))))

    out_folded = pl.pallas_call(
        functools.partial(_reconstructor_kernel, precision=precision),
        out_shape=jax.ShapeDtypeStruct((rows_g, l_out), x_nchw.dtype),
        grid=grid,
        in_specs=[
            pl.BlockSpec((tile, l_in), lambda i: (i, 0)),
            # Constant block index -> factor stays VMEM-resident (no re-DMA).
            # If a profile ever shows input DMA exposed on v6e, add
            # pipeline_mode=pl.Buffered(3) to the x spec above.
            pl.BlockSpec((l_in, l_out), lambda i: (0, 0)),
        ],
        out_specs=pl.BlockSpec((tile, l_out), lambda i: (i, 0)),
        compiler_params=pltpu.CompilerParams(
            dimension_semantics=("parallel",),
            vmem_limit_bytes=vmem_limit),
        cost_estimate=cost,
    )(x_folded, factor_bd)

    # Unfold; mirror torch's second .view of the contiguous (B, H, W, Cout)
    # result as (B, Cout, H, W) (again a pure reshape, no data movement).
    out_mat = out_folded.reshape(rows_g * group, c_out)
    if rem:
        out_mat = out_mat[:rows]
    return out_mat.reshape(B, c_out, H, W)


def make_reconstructor(factor, *, row_tile=8192,
                       precision=lax.Precision.HIGHEST):
    """Returns a jitted fn(x_nchw); kron(I_G, factor) is built once here."""
    c_in, c_out = factor.shape
    group = _lane_fold_group(c_in, c_out)
    factor_bd = jnp.kron(jnp.eye(group, dtype=jnp.float32),
                         factor.astype(jnp.float32))

    @jax.jit
    def fn(x_nchw):
        return _reconstructor_impl(x_nchw, factor_bd, c_in, c_out, group,
                                   row_tile=row_tile, precision=precision)

    return fn


def reconstructor(x_nchw, factor, **kwargs):
    """Convenience one-shot wrapper (prefer make_reconstructor for reuse)."""
    return make_reconstructor(factor, **kwargs)(x_nchw)


def _reference(x_nchw, factor):
    """Pure-JAX reference mirroring the torch forward exactly."""
    B, C, H, W = x_nchw.shape
    x = x_nchw.reshape(B, H, W, C)
    x = jnp.maximum(x + 1.0, 0.0) * 7.0
    x = jnp.exp2(x) - 1.0
    x = jnp.matmul(x, factor, precision=lax.Precision.HIGHEST)
    Cout = factor.shape[1]
    x = x.reshape(B, Cout, H, W)
    x = jnp.maximum(x + 1.0, 1.0)
    x = jnp.log2(x)
    return x / 7.0 - 1.0


if __name__ == "__main__":
    key = jax.random.PRNGKey(0)
    k_x, k_f, k_x2, k_f2 = jax.random.split(key, 4)

    # Test 1: nominal module shape (B, C, H, W) = (2, 4, 16, 16), square factor.
    # rows % G == 0 -> no padding, no output slice; 2 grid steps.
    B, C, H, W = 2, 4, 16, 16
    x = jax.random.uniform(k_x, (B, C, H, W), dtype=jnp.float32,
                           minval=-1.0, maxval=0.5)
    factor = (jax.random.uniform(k_f, (C, C), dtype=jnp.float32,
                                 minval=0.0, maxval=1.0) / C)

    recon = make_reconstructor(factor)
    out = jax.block_until_ready(recon(x))
    ref = _reference(x, factor)
    assert out.shape == (B, C, H, W)
    assert jnp.allclose(out, ref, rtol=1e-4, atol=1e-4), (
        float(jnp.max(jnp.abs(out - ref))))

    # Test 2: non-square factor (Cout != C) exercising the generalized lane
    # fold and a ragged (masked) final grid block.
    B2, C2, Cout2, H2, W2 = 2, 4, 2, 24, 24
    x2 = jax.random.uniform(k_x2, (B2, C2, H2, W2), dtype=jnp.float32,
                            minval=-1.0, maxval=0.5)
    factor2 = (jax.random.uniform(k_f2, (C2, Cout2), dtype=jnp.float32,
                                  minval=0.0, maxval=1.0) / C2)
    out2 = jax.block_until_ready(make_reconstructor(factor2)(x2))
    ref2 = _reference(x2, factor2)
    assert out2.shape == (B2, Cout2, H2, W2)
    assert jnp.allclose(out2, ref2, rtol=1e-4, atol=1e-4), (
        float(jnp.max(jnp.abs(out2 - ref2))))

    print("KERNEL_OK")
</pallas_src>

<mosaic_0001>
module attributes {stable_mosaic.version = 11 : i64} {
  func.func @_reconstructor_kernel(%arg0: i32, %arg1: memref<8x128xf32, #tpu.memory_space<vmem>>, %arg2: memref<128x128xf32, #tpu.memory_space<vmem>>, %arg3: memref<8x128xf32, #tpu.memory_space<vmem>>) attributes {dimension_semantics = [#tpu.dimension_semantics<parallel>], iteration_bounds = array<i64: 2>, scalar_prefetch = 0 : i64, scratch_operands = 0 : i64, tpu.core_type = #tpu.core_type<tc>, window_params = [{transform_indices = @transform_0, window_bounds = array<i64: 8, 128>}, {pipeline_mode = #tpu.pipeline_mode<synchronous>, transform_indices = @transform_1, window_bounds = array<i64: 128, 128>}, {transform_indices = @transform_2, window_bounds = array<i64: 8, 128>}]} {
    %c0 = arith.constant 0 : index
    %c0_0 = arith.constant 0 : index
    %0 = vector.load %arg1[%c0, %c0_0] : memref<8x128xf32, #tpu.memory_space<vmem>>, vector<8x128xf32>
    %cst = arith.constant 1.000000e+00 : f32
    %1 = vector.broadcast %cst : f32 to vector<8x128xf32>
    %2 = arith.addf %0, %1 : vector<8x128xf32>
    %cst_1 = arith.constant 0.000000e+00 : f32
    %3 = vector.broadcast %cst_1 : f32 to vector<8x128xf32>
    %4 = arith.maximumf %2, %3 : vector<8x128xf32>
    %cst_2 = arith.constant 4.85203028 : f32
    %5 = vector.broadcast %cst_2 : f32 to vector<8x128xf32>
    %6 = arith.mulf %4, %5 : vector<8x128xf32>
    %7 = math.exp %6 : vector<8x128xf32>
    %cst_3 = arith.constant 1.000000e+00 : f32
    %8 = vector.broadcast %cst_3 : f32 to vector<8x128xf32>
    %9 = arith.subf %7, %8 : vector<8x128xf32>
    %c0_4 = arith.constant 0 : index
    %c0_5 = arith.constant 0 : index
    %10 = vector.load %arg2[%c0_4, %c0_5] : memref<128x128xf32, #tpu.memory_space<vmem>>, vector<128x128xf32>
    %cst_6 = arith.constant dense<0.000000e+00> : vector<8x128xf32>
    %11 = tpu.matmul %9, %10, %cst_6 {dimension_numbers = #tpu.dot_dimension_numbers<[1], [0], [0], [1], [0, 0, 1, 1], [], []>, precision = #tpu.contract_precision<fp32>} : vector<8x128xf32>, vector<128x128xf32>, vector<8x128xf32> -> vector<8x128xf32>
    %cst_7 = arith.constant 1.000000e+00 : f32
    %12 = vector.broadcast %cst_7 : f32 to vector<8x128xf32>
    %13 = arith.addf %11, %12 : vector<8x128xf32>
    %cst_8 = arith.constant 1.000000e+00 : f32
    %14 = vector.broadcast %cst_8 : f32 to vector<8x128xf32>
    %15 = arith.maximumf %13, %14 : vector<8x128xf32>
    %16 = math.log %15 : vector<8x128xf32>
    %cst_9 = arith.constant 0.206099287 : f32
    %17 = vector.broadcast %cst_9 : f32 to vector<8x128xf32>
    %18 = arith.mulf %16, %17 : vector<8x128xf32>
    %cst_10 = arith.constant 1.000000e+00 : f32
    %19 = vector.broadcast %cst_10 : f32 to vector<8x128xf32>
    %20 = arith.subf %18, %19 : vector<8x128xf32>
    %c0_11 = arith.constant 0 : index
    %c0_12 = arith.constant 0 : index
    %21 = vector.load %arg3[%c0_11, %c0_12] : memref<8x128xf32, #tpu.memory_space<vmem>>, vector<8x128xf32>
    tpu.vector_store %arg3[%c0_11, %c0_12], %20 {strides = array<i32>} : memref<8x128xf32, #tpu.memory_space<vmem>>, vector<8x128xf32>,
    return
  }
  func.func @transform_0(%arg0: i32) -> (i32, i32) {
    %c0_i32 = arith.constant 0 : i32
    %c0_i32_0 = arith.constant 0 : i32
    return %arg0, %c0_i32 : i32, i32
  }
  func.func @transform_1(%arg0: i32) -> (i32, i32) {
    %c0_i32 = arith.constant 0 : i32
    %c0_i32_0 = arith.constant 0 : i32
    %c0_i32_1 = arith.constant 0 : i32
    return %c0_i32, %c0_i32_0 : i32, i32
  }
  func.func @transform_2(%arg0: i32) -> (i32, i32) {
    %c0_i32 = arith.constant 0 : i32
    %c0_i32_0 = arith.constant 0 : i32
    return %arg0, %c0_i32 : i32, i32
  }
}

</mosaic_0001>

<llo_original>
// kernel: fn.1
$region0: #{fn.1}
  #allocation0 [shape = 'u32[]', space=smem, size = 0x4, offset = 0x4, fixed_abs, tag = 'smem constant byte address 0x4 - core index']
  #allocation1 [shape = 'u32[144,128]{1,0:T(1,128)}', space=vmem, size = 0x12000, scoped, tag = 'internal scratch']
  %s0 = inlined_call_operand.vmem [shape: f32[16,128], index: 0, kind: input, shape index: {}]
  %s1 = inlined_call_operand.vmem [shape: f32[128,128], index: 1, kind: input, shape index: {}]
  %s2 = inlined_call_operand.vmem [shape: f32[16,128], index: 2, kind: output, shape index: {}]
  %s3 = sld [smem:[#allocation0]]
  $region41: #{fn.1} parent=0
    _
  %s5 = ssub.s32 1, %s3
  %s6 = scalar_select 0, %s5, %s3
  loop: start=0, step=1, limit=4
  $region2: #{fn.1} parent=0 // loop_pre_header
    _
  $region3: #{fn.1} parent=0 // loop_header
    %s8 = sphi 0, %s12
    %p9 = scmp.ge.s32.totalorder %s8, 4
    %s18 = sphi 0, %s20
    %s21 = sphi 0, %s18
    %s22 = sphi 0, %s21
    %s38 = sphi 0, %s22
    %s42 = sphi 0, %s42
    %s44 = sphi 0, %s42
    %s45 = sphi 0, %s44
    %s59 = sphi 0, %s45
    %s65 = sphi 0, %s67
    %s68 = sphi 0, %s65
    %s69 = sphi 0, %s68
    %s85 = sphi 0, %s69
  $region4: #{fn.1} parent=0 // loop_header_branch
    %11 = sbr.rel (%p9) target = $region8
  $region5: #{fn.1} parent=0 // loop_body
    %s13 = ssub.s32 %s8, 1
    %s14 = ssub.s32 %s8, 2
    %s15 = sadd.s32 %s8, 1
    %s16 = ssub.s32 %s8, %s15
    %p17 = scmp.eq.s32.totalorder %s16, 0
    %s19 = sadd.s32 %s18, 1
    %s20 = scalar_select %p17, %s18, %s19
    %p23 = pneg %p17
    %p24 = scmp.eq.s32.totalorder %s8, 1
    %p25 = por %p23, %p24
    %p26 = scmp.ne.s32.totalorder %s18, %s21
    %p27 = scmp.eq.s32.totalorder %s8, 0
    %p28 = por %p26, %p27
    %p29 = scmp.ne.s32.totalorder %s18, %s21
    %p30 = scmp.eq.s32.totalorder %s13, 1
    %p31 = por %p29, %p30
    %p32 = scmp.ne.s32.totalorder %s21, %s22
    %p33 = scmp.eq.s32.totalorder %s13, 0
    %p34 = por %p32, %p33
    %p35 = scmp.ne.s32.totalorder %s21, %s22
    %p36 = scmp.eq.s32.totalorder %s14, 1
    %p37 = por %p35, %p36
    %p39 = scmp.ne.s32.totalorder %s22, %s38
    %p40 = scmp.eq.s32.totalorder %s14, 0
    %p41 = por %p39, %p40
    %s43 = sadd.s32 %s42, 1
    %p46 = scmp.eq.s32.totalorder %s8, 1
    %p47 = scmp.ne.s32.totalorder %s42, %s44
    %p48 = scmp.eq.s32.totalorder %s8, 0
    %p49 = por %p47, %p48
    %p50 = scmp.ne.s32.totalorder %s42, %s44
    %p51 = scmp.eq.s32.totalorder %s13, 1
    %p52 = por %p50, %p51
    %p53 = scmp.ne.s32.totalorder %s44, %s45
    %p54 = scmp.eq.s32.totalorder %s13, 0
    %p55 = por %p53, %p54
    %p56 = scmp.ne.s32.totalorder %s44, %s45
    %p57 = scmp.eq.s32.totalorder %s14, 1
    %p58 = por %p56, %p57
    %p60 = scmp.ne.s32.totalorder %s45, %s59
    %p61 = scmp.eq.s32.totalorder %s14, 0
    %p62 = por %p60, %p61
    %s63 = ssub.s32 %s8, %s15
    %p64 = scmp.eq.s32.totalorder %s63, 0
    %s66 = sadd.s32 %s65, 1
    %s67 = scalar_select %p64, %s65, %s66
    %p70 = pneg %p64
    %p71 = scmp.eq.s32.totalorder %s8, 1
    %p72 = por %p70, %p71
    %p73 = scmp.ne.s32.totalorder %s65, %s68
    %p74 = scmp.eq.s32.totalorder %s8, 0
    %p75 = por %p73, %p74
    %p76 = scmp.ne.s32.totalorder %s65, %s68
    %p77 = scmp.eq.s32.totalorder %s13, 1
    %p78 = por %p76, %p77
    %p79 = scmp.ne.s32.totalorder %s68, %s69
    %p80 = scmp.eq.s32.totalorder %s13, 0
    %p81 = por %p79, %p80
    %p82 = scmp.ne.s32.totalorder %s68, %s69
    %p83 = scmp.eq.s32.totalorder %s14, 1
    %p84 = por %p82, %p83
    %p86 = scmp.ne.s32.totalorder %s69, %s85
    %p87 = scmp.eq.s32.totalorder %s14, 0
    %p88 = por %p86, %p87
    %p89 = scmp.le.s32.totalorder 1, %s8
    %p90 = scmp.lt.s32.totalorder %s8, 3
    %p91 = pnand %p89, %p90
    %p92 = pneg %p91
    // Predicated region
    $region9: #{fn.1} parent=5 // pred_check
      _
    $region10: #{fn.1} parent=5 // pred_check_branch
      %94 = sbr.rel (%p91) target = $region12
    $region11: #{fn.1} parent=5 // pred_region
      %s95 = ssub.s32 %s8, 1
      // Predicated region
      $region13: #{fn.1} parent=11 // pred_check
        %p96 = pneg %p55
      $region14: #{fn.1} parent=11 // pred_check_branch
        %98 = sbr.rel (%p96) target = $region16
      $region15: #{fn.1} parent=11 // pred_region
        _
      $region16: #{fn.1} parent=11 // pred_fallthru
        _
    $region12: #{fn.1} parent=5 // pred_fallthru
      _
    %p99 = scmp.lt.s32.totalorder %s8, 2
    // Predicated region
    $region17: #{fn.1} parent=5 // pred_check
      %p100 = pneg %p99
    $region18: #{fn.1} parent=5 // pred_check_branch
      %102 = sbr.rel (%p100) target = $region20
    $region19: #{fn.1} parent=5 // pred_region
      // Predicated region
      $region21: #{fn.1} parent=19 // pred_check
        %p103 = pneg %p28
      $region22: #{fn.1} parent=19 // pred_check_branch
        %105 = sbr.rel (%p103) target = $region24
      $region23: #{fn.1} parent=19 // pred_region
        %p106 = scmp.lt.s32.totalorder %s8, 1
        %s107 = scalar_select %p106, %s8, 1
        %s108 = smul.addr %s107, 8
        %s109 = scalar_lea.vmem %s0, %s108
      $region24: #{fn.1} parent=19 // pred_fallthru
        _
    $region20: #{fn.1} parent=5 // pred_fallthru
      _
    %p110 = scmp.le.s32.totalorder 1, %s8
    %p111 = scmp.lt.s32.totalorder %s8, 3
    %p112 = pnand %p110, %p111
    %p113 = pneg %p112
    // Predicated region
    $region25: #{fn.1} parent=5 // pred_check
      _
    $region26: #{fn.1} parent=5 // pred_check_branch
      %115 = sbr.rel (%p112) target = $region28
    $region27: #{fn.1} parent=5 // pred_region
      %s116 = ssub.s32 %s8, 1
      %p117 = scmp.lt.s32.totalorder %s13, 1
      %s118 = scalar_select %p117, %s13, 1
      %s119 = smul.addr %s118, 8
      %s120 = scalar_lea.vmem %s0, %s119
      %p121 = pneg %p34
      %p122 = pneg %p31
      %p123 = pneg %p55
      %p124 = pneg %p52
      %p125 = pneg %p81
      %p126 = pneg %p78
      %p127 = scmp.lt.s32.totalorder %s13, 1
      %s128 = scalar_select %p127, %s13, 1
      %s129 = smul.addr %s128, 8
      %s130 = scalar_lea.vmem %s2, %s129
      %p131 = scmp.lt.s32.totalorder %s13, 1
      %s132 = scalar_select %p131, %s13, 1
      %s133 = smul.addr %s132, 8
      %s134 = scalar_lea.vmem %s0, %s133
      %p135 = scmp.lt.s32.totalorder %s13, 1
      %s136 = scalar_select %p135, %s13, 1
      %s137 = smul.addr %s136, 8
      %s138 = scalar_lea.vmem %s2, %s137
      %v139 = vld [vmem:[%s134] sm:$0xff]
      %v140 = vadd.f32 %v139, 1.0
      %v141 = vmax.f32 %v140, 0.0
      %v142 = vmul.f32 %v141, 4.8520303
      %v143 = vmul.f32 %v142, 1.442695
      %v144 = vpow.pop %v143
      %v145 = vsub.f32 %v144, 1.0
      %v146 = vld [vmem:[%s1] sm:$0xff]
      %v147 = vld [vmem:[%s1 + $0x8] sm:$0xff]
      %v148 = vld [vmem:[%s1 + $0x10] sm:$0xff]
      %v149 = vld [vmem:[%s1 + $0x18] sm:$0xff]
      %v150 = vld [vmem:[%s1 + $0x20] sm:$0xff]
      %v151 = vld [vmem:[%s1 + $0x28] sm:$0xff]
      %v152 = vld [vmem:[%s1 + $0x30] sm:$0xff]
      %v153 = vld [vmem:[%s1 + $0x38] sm:$0xff]
      %v154 = vld [vmem:[%s1 + $0x40] sm:$0xff]
      %v155 = vld [vmem:[%s1 + $0x48] sm:$0xff]
      %v156 = vld [vmem:[%s1 + $0x50] sm:$0xff]
      %v157 = vld [vmem:[%s1 + $0x58] sm:$0xff]
      %v158 = vld [vmem:[%s1 + $0x60] sm:$0xff]
      %v159 = vld [vmem:[%s1 + $0x68] sm:$0xff]
      %v160 = vld [vmem:[%s1 + $0x70] sm:$0xff]
      %v161 = vld [vmem:[%s1 + $0x78] sm:$0xff]
      %162 = vmatprep.subr.mxu0 0.0
      %v163 = vand.u32 %v161, 4294901760
      %164 = vmatpush1.msra.mxu0 %v163
      %165 = vmatprep.subr.mxu0 0.0
      %v166 = vand.u32 %v160, 4294901760
      %167 = vmatpush1.msra.mxu0 %v166
      %168 = vmatprep.subr.mxu0 0.0
      %v169 = vand.u32 %v159, 4294901760
      %170 = vmatpush1.msra.mxu0 %v169
      %171 = vmatprep.subr.mxu0 0.0
      %v172 = vand.u32 %v158, 4294901760
      %173 = vmatpush1.msra.mxu0 %v172
      %174 = vmatprep.subr.mxu0 0.0
      %v175 = vand.u32 %v157, 4294901760
      %176 = vmatpush1.msra.mxu0 %v175
      %177 = vmatprep.subr.mxu0 0.0
      %v178 = vand.u32 %v156, 4294901760
      %179 = vmatpush1.msra.mxu0 %v178
      %180 = vmatprep.subr.mxu0 0.0
      %v181 = vand.u32 %v155, 4294901760
      %182 = vmatpush1.msra.mxu0 %v181
      %183 = vmatprep.subr.mxu0 0.0
      %v184 = vand.u32 %v154, 4294901760
      %185 = vmatpush1.msra.mxu0 %v184
      %186 = vmatprep.subr.mxu0 0.0
      %v187 = vand.u32 %v153, 4294901760
      %188 = vmatpush1.msra.mxu0 %v187
      %189 = vmatprep.subr.mxu0 0.0
      %v190 = vand.u32 %v152, 4294901760
      %191 = vmatpush1.msra.mxu0 %v190
      %192 = vmatprep.subr.mxu0 0.0
      %v193 = vand.u32 %v151, 4294901760
      %194 = vmatpush1.msra.mxu0 %v193
      %195 = vmatprep.subr.mxu0 0.0
      %v196 = vand.u32 %v150, 4294901760
      %197 = vmatpush1.msra.mxu0 %v196
      %198 = vmatprep.subr.mxu0 0.0
      %v199 = vand.u32 %v149, 4294901760
      %200 = vmatpush1.msra.mxu0 %v199
      %201 = vmatprep.subr.mxu0 0.0
      %v202 = vand.u32 %v148, 4294901760
      %203 = vmatpush1.msra.mxu0 %v202
      %204 = vmatprep.subr.mxu0 0.0
      %v205 = vand.u32 %v147, 4294901760
      %206 = vmatpush1.msra.mxu0 %v205
      %207 = vmatprep.subr.mxu0 0.0
      %v208 = vand.u32 %v146, 4294901760
      %209 = vmatpush1.msra.mxu0 %v208
      %210 = vmatprep.subr.mxu0 0.0
      %211 = vmatpush2.msra.mxu0 0.0
      %212 = vmatprep.subr.mxu0 0.0
      %213 = vmatpush2.msra.mxu0 0.0
      %214 = vmatprep.subr.mxu0 0.0
      %215 = vmatpush2.msra.mxu0 0.0
      %216 = vmatprep.subr.mxu0 0.0
      %217 = vmatpush2.msra.mxu0 0.0
      %218 = vmatprep.subr.mxu0 0.0
      %219 = vmatpush2.msra.mxu0 0.0
      %220 = vmatprep.subr.mxu0 0.0
      %221 = vmatpush2.msra.mxu0 0.0
      %222 = vmatprep.subr.mxu0 0.0
      %223 = vmatpush2.msra.mxu0 0.0
      %224 = vmatprep.subr.mxu0 0.0
      %225 = vmatpush2.msra.mxu0 0.0
      %226 = vmatprep.subr.mxu0 0.0
      %227 = vmatpush2.msra.mxu0 0.0
      %228 = vmatprep.subr.mxu0 0.0
      %229 = vmatpush2.msra.mxu0 0.0
      %230 = vmatprep.subr.mxu0 0.0
      %231 = vmatpush2.msra.mxu0 0.0
      %232 = vmatprep.subr.mxu0 0.0
      %233 = vmatpush2.msra.mxu0 0.0
      %234 = vmatprep.subr.mxu0 0.0
      %235 = vmatpush2.msra.mxu0 0.0
      %236 = vmatprep.subr.mxu0 0.0
      %237 = vmatpush2.msra.mxu0 0.0
      %238 = vmatprep.subr.mxu0 0.0
      %239 = vmatpush2.msra.mxu0 0.0
      %240 = vmatprep.subr.mxu0 0.0
      %241 = vmatpush2.msra.mxu0 0.0
      %242 = vmatprep.mubr.f32.mxu0 0.0
      %v243 = vand.u32 %v145, 4294901760
      %v244 = vsub.f32 %v145, %v243
      %v245 = vand.u32 %v244, 4294901760
      %v246 = vsub.f32 %v244, %v245
      %v247 = vand.u32 %v246, 4294901760
      %248 = vmatmul.mubr.f32.gmra.mxu0 %v247
      %v249 = vpop.f32.mrf.mxu0
      %v250 = vadd.f32 1.0, %v249
      %v251 = vpop.f32.mrf.mxu0
      %252 = vdwg.mxu0
      %253 = vmatprep.subr.mxu0 0.0
      %v254 = vand.u32 %v161, 4294901760
      %v255 = vsub.f32 %v161, %v254
      %v256 = vand.u32 %v255, 4294901760
      %v257 = vsub.f32 %v255, %v256
      %v258 = vand.u32 %v257, 4294901760
      %259 = vmatpush1.msra.mxu0 %v258
      %260 = vmatprep.subr.mxu0 0.0
      %v261 = vand.u32 %v160, 4294901760
      %v262 = vsub.f32 %v160, %v261
      %v263 = vand.u32 %v262, 4294901760
      %v264 = vsub.f32 %v262, %v263
      %v265 = vand.u32 %v264, 4294901760
      %266 = vmatpush1.msra.mxu0 %v265
      %267 = vmatprep.subr.mxu0 0.0
      %v268 = vand.u32 %v159, 4294901760
      %v269 = vsub.f32 %v159, %v268
      %v270 = vand.u32 %v269, 4294901760
      %v271 = vsub.f32 %v269, %v270
      %v272 = vand.u32 %v271, 4294901760
      %273 = vmatpush1.msra.mxu0 %v272
      %274 = vmatprep.subr.mxu0 0.0
      %v275 = vand.u32 %v158, 4294901760
      %v276 = vsub.f32 %v158, %v275
      %v277 = vand.u32 %v276, 4294901760
      %v278 = vsub.f32 %v276, %v277
      %v279 = vand.u32 %v278, 4294901760
      %280 = vmatpush1.msra.mxu0 %v279
      %281 = vmatprep.subr.mxu0 0.0
      %v282 = vand.u32 %v157, 4294901760
      %v283 = vsub.f32 %v157, %v282
      %v284 = vand.u32 %v283, 4294901760
      %v285 = vsub.f32 %v283, %v284
      %v286 = vand.u32 %v285, 4294901760
      %287 = vmatpush1.msra.mxu0 %v286
      %288 = vmatprep.subr.mxu0 0.0
      %v289 = vand.u32 %v156, 4294901760
      %v290 = vsub.f32 %v156, %v289
      %v291 = vand.u32 %v290, 4294901760
      %v292 = vsub.f32 %v290, %v291
      %v293 = vand.u32 %v292, 4294901760
      %294 = vmatpush1.msra.mxu0 %v293
      %295 = vmatprep.subr.mxu0 0.0
      %v296 = vand.u32 %v155, 4294901760
      %v297 = vsub.f32 %v155, %v296
      %v298 = vand.u32 %v297, 4294901760
      %v299 = vsub.f32 %v297, %v298
      %v300 = vand.u32 %v299, 4294901760
      %301 = vmatpush1.msra.mxu0 %v300
      %302 = vmatprep.subr.mxu0 0.0
      %v303 = vand.u32 %v154, 4294901760
      %v304 = vsub.f32 %v154, %v303
      %v305 = vand.u32 %v304, 4294901760
      %v306 = vsub.f32 %v304, %v305
      %v307 = vand.u32 %v306, 4294901760
      %308 = vmatpush1.msra.mxu0 %v307
      %309 = vmatprep.subr.mxu0 0.0
      %v310 = vand.u32 %v153, 4294901760
      %v311 = vsub.f32 %v153, %v310
      %v312 = vand.u32 %v311, 4294901760
      %v313 = vsub.f32 %v311, %v312
      %v314 = vand.u32 %v313, 4294901760
      %315 = vmatpush1.msra.mxu0 %v314
      %316 = vmatprep.subr.mxu0 0.0
      %v317 = vand.u32 %v152, 4294901760
      %v318 = vsub.f32 %v152, %v317
      %v319 = vand.u32 %v318, 4294901760
      %v320 = vsub.f32 %v318, %v319
      %v321 = vand.u32 %v320, 4294901760
      %322 = vmatpush1.msra.mxu0 %v321
      %323 = vmatprep.subr.mxu0 0.0
      %v324 = vand.u32 %v151, 4294901760
      %v325 = vsub.f32 %v151, %v324
      %v326 = vand.u32 %v325, 4294901760
      %v327 = vsub.f32 %v325, %v326
      %v328 = vand.u32 %v327, 4294901760
      %329 = vmatpush1.msra.mxu0 %v328
      %330 = vmatprep.subr.mxu0 0.0
      %v331 = vand.u32 %v150, 4294901760
      %v332 = vsub.f32 %v150, %v331
      %v333 = vand.u32 %v332, 4294901760
      %v334 = vsub.f32 %v332, %v333
      %v335 = vand.u32 %v334, 4294901760
      %336 = vmatpush1.msra.mxu0 %v335
      %337 = vmatprep.subr.mxu0 0.0
      %v338 = vand.u32 %v149, 4294901760
      %v339 = vsub.f32 %v149, %v338
      %v340 = vand.u32 %v339, 4294901760
      %v341 = vsub.f32 %v339, %v340
      %v342 = vand.u32 %v341, 4294901760
      %343 = vmatpush1.msra.mxu0 %v342
      %344 = vmatprep.subr.mxu0 0.0
      %v345 = vand.u32 %v148, 4294901760
      %v346 = vsub.f32 %v148, %v345
      %v347 = vand.u32 %v346, 4294901760
      %v348 = vsub.f32 %v346, %v347
      %v349 = vand.u32 %v348, 4294901760
      %350 = vmatpush1.msra.mxu0 %v349
      %351 = vmatprep.subr.mxu0 0.0
      %v352 = vand.u32 %v147, 4294901760
      %v353 = vsub.f32 %v147, %v352
      %v354 = vand.u32 %v353, 4294901760
      %v355 = vsub.f32 %v353, %v354
      %v356 = vand.u32 %v355, 4294901760
      %357 = vmatpush1.msra.mxu0 %v356
      %358 = vmatprep.subr.mxu0 0.0
      %v359 = vand.u32 %v146, 4294901760
      %v360 = vsub.f32 %v146, %v359
      %v361 = vand.u32 %v360, 4294901760
      %v362 = vsub.f32 %v360, %v361
      %v363 = vand.u32 %v362, 4294901760
      %364 = vmatpush1.msra.mxu0 %v363
      %365 = vmatprep.subr.mxu0 0.0
      %366 = vmatpush2.msra.mxu0 0.0
      %367 = vmatprep.subr.mxu0 0.0
      %368 = vmatpush2.msra.mxu0 0.0
      %369 = vmatprep.subr.mxu0 0.0
      %370 = vmatpush2.msra.mxu0 0.0
      %371 = vmatprep.subr.mxu0 0.0
      %372 = vmatpush2.msra.mxu0 0.0
      %373 = vmatprep.subr.mxu0 0.0
      %374 = vmatpush2.msra.mxu0 0.0
      %375 = vmatprep.subr.mxu0 0.0
      %376 = vmatpush2.msra.mxu0 0.0
      %377 = vmatprep.subr.mxu0 0.0
      %378 = vmatpush2.msra.mxu0 0.0
      %379 = vmatprep.subr.mxu0 0.0
      %380 = vmatpush2.msra.mxu0 0.0
      %381 = vmatprep.subr.mxu0 0.0
      %382 = vmatpush2.msra.mxu0 0.0
      %383 = vmatprep.subr.mxu0 0.0
      %384 = vmatpush2.msra.mxu0 0.0
      %385 = vmatprep.subr.mxu0 0.0
      %386 = vmatpush2.msra.mxu0 0.0
      %387 = vmatprep.subr.mxu0 0.0
      %388 = vmatpush2.msra.mxu0 0.0
      %389 = vmatprep.subr.mxu0 0.0
      %390 = vmatpush2.msra.mxu0 0.0
      %391 = vmatprep.subr.mxu0 0.0
      %392 = vmatpush2.msra.mxu0 0.0
      %393 = vmatprep.subr.mxu0 0.0
      %394 = vmatpush2.msra.mxu0 0.0
      %395 = vmatprep.subr.mxu0 0.0
      %396 = vmatpush2.msra.mxu0 0.0
      %397 = vmatprep.mubr.f32.mxu0 0.0
      %v398 = vand.u32 %v145, 4294901760
      %399 = vmatmul.mubr.f32.gmra.mxu0 %v398
      %v400 = vpop.f32.mrf.mxu0
      %v401 = vadd.f32 %v250, %v400
      %v402 = vpop.f32.mrf.mxu0
      %403 = vdwg.mxu0
      %404 = vmatprep.subr.mxu0 0.0
      %v405 = vand.u32 %v161, 4294901760
      %v406 = vsub.f32 %v161, %v405
      %407 = vmatpush1.msra.mxu0 %v406
      %408 = vmatprep.subr.mxu0 0.0
      %v409 = vand.u32 %v160, 4294901760
      %v410 = vsub.f32 %v160, %v409
      %411 = vmatpush1.msra.mxu0 %v410
      %412 = vmatprep.subr.mxu0 0.0
      %v413 = vand.u32 %v159, 4294901760
      %v414 = vsub.f32 %v159, %v413
      %415 = vmatpush1.msra.mxu0 %v414
      %416 = vmatprep.subr.mxu0 0.0
      %v417 = vand.u32 %v158, 4294901760
      %v418 = vsub.f32 %v158, %v417
      %419 = vmatpush1.msra.mxu0 %v418
      %420 = vmatprep.subr.mxu0 0.0
      %v421 = vand.u32 %v157, 4294901760
      %v422 = vsub.f32 %v157, %v421
      %423 = vmatpush1.msra.mxu0 %v422
      %424 = vmatprep.subr.mxu0 0.0
      %v425 = vand.u32 %v156, 4294901760
      %v426 = vsub.f32 %v156, %v425
      %427 = vmatpush1.msra.mxu0 %v426
      %428 = vmatprep.subr.mxu0 0.0
      %v429 = vand.u32 %v155, 4294901760
      %v430 = vsub.f32 %v155, %v429
      %431 = vmatpush1.msra.mxu0 %v430
      %432 = vmatprep.subr.mxu0 0.0
      %v433 = vand.u32 %v154, 4294901760
      %v434 = vsub.f32 %v154, %v433
      %435 = vmatpush1.msra.mxu0 %v434
      %436 = vmatprep.subr.mxu0 0.0
      %v437 = vand.u32 %v153, 4294901760
      %v438 = vsub.f32 %v153, %v437
      %439 = vmatpush1.msra.mxu0 %v438
      %440 = vmatprep.subr.mxu0 0.0
      %v441 = vand.u32 %v152, 4294901760
      %v442 = vsub.f32 %v152, %v441
      %443 = vmatpush1.msra.mxu0 %v442
      %444 = vmatprep.subr.mxu0 0.0
      %v445 = vand.u32 %v151, 4294901760
      %v446 = vsub.f32 %v151, %v445
      %447 = vmatpush1.msra.mxu0 %v446
      %448 = vmatprep.subr.mxu0 0.0
      %v449 = vand.u32 %v150, 4294901760
      %v450 = vsub.f32 %v150, %v449
      %451 = vmatpush1.msra.mxu0 %v450
      %452 = vmatprep.subr.mxu0 0.0
      %v453 = vand.u32 %v149, 4294901760
      %v454 = vsub.f32 %v149, %v453
      %455 = vmatpush1.msra.mxu0 %v454
      %456 = vmatprep.subr.mxu0 0.0
      %v457 = vand.u32 %v148, 4294901760
      %v458 = vsub.f32 %v148, %v457
      %459 = vmatpush1.msra.mxu0 %v458
      %460 = vmatprep.subr.mxu0 0.0
      %v461 = vand.u32 %v147, 4294901760
      %v462 = vsub.f32 %v147, %v461
      %463 = vmatpush1.msra.mxu0 %v462
      %464 = vmatprep.subr.mxu0 0.0
      %v465 = vand.u32 %v146, 4294901760
      %v466 = vsub.f32 %v146, %v465
      %467 = vmatpush1.msra.mxu0 %v466
      %468 = vmatprep.subr.mxu0 0.0
      %469 = vmatpush2.msra.mxu0 0.0
      %470 = vmatprep.subr.mxu0 0.0
      %471 = vmatpush2.msra.mxu0 0.0
      %472 = vmatprep.subr.mxu0 0.0
      %473 = vmatpush2.msra.mxu0 0.0
      %474 = vmatprep.subr.mxu0 0.0
      %475 = vmatpush2.msra.mxu0 0.0
      %476 = vmatprep.subr.mxu0 0.0
      %477 = vmatpush2.msra.mxu0 0.0
      %478 = vmatprep.subr.mxu0 0.0
      %479 = vmatpush2.msra.mxu0 0.0
      %480 = vmatprep.subr.mxu0 0.0
      %481 = vmatpush2.msra.mxu0 0.0
      %482 = vmatprep.subr.mxu0 0.0
      %483 = vmatpush2.msra.mxu0 0.0
      %484 = vmatprep.subr.mxu0 0.0
      %485 = vmatpush2.msra.mxu0 0.0
      %486 = vmatprep.subr.mxu0 0.0
      %487 = vmatpush2.msra.mxu0 0.0
      %488 = vmatprep.subr.mxu0 0.0
      %489 = vmatpush2.msra.mxu0 0.0
      %490 = vmatprep.subr.mxu0 0.0
      %491 = vmatpush2.msra.mxu0 0.0
      %492 = vmatprep.subr.mxu0 0.0
      %493 = vmatpush2.msra.mxu0 0.0
      %494 = vmatprep.subr.mxu0 0.0
      %495 = vmatpush2.msra.mxu0 0.0
      %496 = vmatprep.subr.mxu0 0.0
      %497 = vmatpush2.msra.mxu0 0.0
      %498 = vmatprep.subr.mxu0 0.0
      %499 = vmatpush2.msra.mxu0 0.0
      %500 = vmatprep.mubr.f32.mxu0 0.0
      %v501 = vand.u32 %v145, 4294901760
      %v502 = vsub.f32 %v145, %v501
      %503 = vmatmul.mubr.f32.gmra.mxu0 %v502
      %v504 = vpop.f32.mrf.mxu0
      %v505 = vadd.f32 %v401, %v504
      %v506 = vpop.f32.mrf.mxu0
      %507 = vdwg.mxu0
      %508 = vmatprep.subr.mxu0 0.0
      %v509 = vand.u32 %v161, 4294901760
      %510 = vmatpush1.msra.mxu0 %v509
      %511 = vmatprep.subr.mxu0 0.0
      %v512 = vand.u32 %v160, 4294901760
      %513 = vmatpush1.msra.mxu0 %v512
      %514 = vmatprep.subr.mxu0 0.0
      %v515 = vand.u32 %v159, 4294901760
      %516 = vmatpush1.msra.mxu0 %v515
      %517 = vmatprep.subr.mxu0 0.0
      %v518 = vand.u32 %v158, 4294901760
      %519 = vmatpush1.msra.mxu0 %v518
      %520 = vmatprep.subr.mxu0 0.0
      %v521 = vand.u32 %v157, 4294901760
      %522 = vmatpush1.msra.mxu0 %v521
      %523 = vmatprep.subr.mxu0 0.0
      %v524 = vand.u32 %v156, 4294901760
      %525 = vmatpush1.msra.mxu0 %v524
      %526 = vmatprep.subr.mxu0 0.0
      %v527 = vand.u32 %v155, 4294901760
      %528 = vmatpush1.msra.mxu0 %v527
      %529 = vmatprep.subr.mxu0 0.0
      %v530 = vand.u32 %v154, 4294901760
      %531 = vmatpush1.msra.mxu0 %v530
      %532 = vmatprep.subr.mxu0 0.0
      %v533 = vand.u32 %v153, 4294901760
      %534 = vmatpush1.msra.mxu0 %v533
      %535 = vmatprep.subr.mxu0 0.0
      %v536 = vand.u32 %v152, 4294901760
      %537 = vmatpush1.msra.mxu0 %v536
      %538 = vmatprep.subr.mxu0 0.0
      %v539 = vand.u32 %v151, 4294901760
      %540 = vmatpush1.msra.mxu0 %v539
      %541 = vmatprep.subr.mxu0 0.0
      %v542 = vand.u32 %v150, 4294901760
      %543 = vmatpush1.msra.mxu0 %v542
      %544 = vmatprep.subr.mxu0 0.0
      %v545 = vand.u32 %v149, 4294901760
      %546 = vmatpush1.msra.mxu0 %v545
      %547 = vmatprep.subr.mxu0 0.0
      %v548 = vand.u32 %v148, 4294901760
      %549 = vmatpush1.msra.mxu0 %v548
      %550 = vmatprep.subr.mxu0 0.0
      %v551 = vand.u32 %v147, 4294901760
      %552 = vmatpush1.msra.mxu0 %v551
      %553 = vmatprep.subr.mxu0 0.0
      %v554 = vand.u32 %v146, 4294901760
      %555 = vmatpush1.msra.mxu0 %v554
      %556 = vmatprep.subr.mxu0 0.0
      %557 = vmatpush2.msra.mxu0 0.0
      %558 = vmatprep.subr.mxu0 0.0
      %559 = vmatpush2.msra.mxu0 0.0
      %560 = vmatprep.subr.mxu0 0.0
      %561 = vmatpush2.msra.mxu0 0.0
      %562 = vmatprep.subr.mxu0 0.0
      %563 = vmatpush2.msra.mxu0 0.0
      %564 = vmatprep.subr.mxu0 0.0
      %565 = vmatpush2.msra.mxu0 0.0
      %566 = vmatprep.subr.mxu0 0.0
      %567 = vmatpush2.msra.mxu0 0.0
      %568 = vmatprep.subr.mxu0 0.0
      %569 = vmatpush2.msra.mxu0 0.0
      %570 = vmatprep.subr.mxu0 0.0
      %571 = vmatpush2.msra.mxu0 0.0
      %572 = vmatprep.subr.mxu0 0.0
      %573 = vmatpush2.msra.mxu0 0.0
      %574 = vmatprep.subr.mxu0 0.0
      %575 = vmatpush2.msra.mxu0 0.0
      %576 = vmatprep.subr.mxu0 0.0
      %577 = vmatpush2.msra.mxu0 0.0
      %578 = vmatprep.subr.mxu0 0.0
      %579 = vmatpush2.msra.mxu0 0.0
      %580 = vmatprep.subr.mxu0 0.0
      %581 = vmatpush2.msra.mxu0 0.0
      %582 = vmatprep.subr.mxu0 0.0
      %583 = vmatpush2.msra.mxu0 0.0
      %584 = vmatprep.subr.mxu0 0.0
      %585 = vmatpush2.msra.mxu0 0.0
      %586 = vmatprep.subr.mxu0 0.0
      %587 = vmatpush2.msra.mxu0 0.0
      %588 = vmatprep.mubr.f32.mxu0 0.0
      %v589 = vand.u32 %v145, 4294901760
      %v590 = vsub.f32 %v145, %v589
      %v591 = vand.u32 %v590, 4294901760
      %592 = vmatmul.mubr.f32.gmra.mxu0 %v591
      %v593 = vpop.f32.mrf.mxu0
      %v594 = vadd.f32 %v505, %v593
      %v595 = vpop.f32.mrf.mxu0
      %596 = vdwg.mxu0
      %597 = vmatprep.subr.mxu0 0.0
      %v598 = vand.u32 %v161, 4294901760
      %v599 = vsub.f32 %v161, %v598
      %v600 = vand.u32 %v599, 4294901760
      %601 = vmatpush1.msra.mxu0 %v600
      %602 = vmatprep.subr.mxu0 0.0
      %v603 = vand.u32 %v160, 4294901760
      %v604 = vsub.f32 %v160, %v603
      %v605 = vand.u32 %v604, 4294901760
      %606 = vmatpush1.msra.mxu0 %v605
      %607 = vmatprep.subr.mxu0 0.0
      %v608 = vand.u32 %v159, 4294901760
      %v609 = vsub.f32 %v159, %v608
      %v610 = vand.u32 %v609, 4294901760
      %611 = vmatpush1.msra.mxu0 %v610
      %612 = vmatprep.subr.mxu0 0.0
      %v613 = vand.u32 %v158, 4294901760
      %v614 = vsub.f32 %v158, %v613
      %v615 = vand.u32 %v614, 4294901760
      %616 = vmatpush1.msra.mxu0 %v615
      %617 = vmatprep.subr.mxu0 0.0
      %v618 = vand.u32 %v157, 4294901760
      %v619 = vsub.f32 %v157, %v618
      %v620 = vand.u32 %v619, 4294901760
      %621 = vmatpush1.msra.mxu0 %v620
      %622 = vmatprep.subr.mxu0 0.0
      %v623 = vand.u32 %v156, 4294901760
      %v624 = vsub.f32 %v156, %v623
      %v625 = vand.u32 %v624, 4294901760
      %626 = vmatpush1.msra.mxu0 %v625
      %627 = vmatprep.subr.mxu0 0.0
      %v628 = vand.u32 %v155, 4294901760
      %v629 = vsub.f32 %v155, %v628
      %v630 = vand.u32 %v629, 4294901760
      %631 = vmatpush1.msra.mxu0 %v630
      %632 = vmatprep.subr.mxu0 0.0
      %v633 = vand.u32 %v154, 4294901760
      %v634 = vsub.f32 %v154, %v633
      %v635 = vand.u32 %v634, 4294901760
      %636 = vmatpush1.msra.mxu0 %v635
      %637 = vmatprep.subr.mxu0 0.0
      %v638 = vand.u32 %v153, 4294901760
      %v639 = vsub.f32 %v153, %v638
      %v640 = vand.u32 %v639, 4294901760
      %641 = vmatpush1.msra.mxu0 %v640
      %642 = vmatprep.subr.mxu0 0.0
      %v643 = vand.u32 %v152, 4294901760
      %v644 = vsub.f32 %v152, %v643
      %v645 = vand.u32 %v644, 4294901760
      %646 = vmatpush1.msra.mxu0 %v645
      %647 = vmatprep.subr.mxu0 0.0
      %v648 = vand.u32 %v151, 4294901760
      %v649 = vsub.f32 %v151, %v648
      %v650 = vand.u32 %v649, 4294901760
      %651 = vmatpush1.msra.mxu0 %v650
      %652 = vmatprep.subr.mxu0 0.0
      %v653 = vand.u32 %v150, 4294901760
      %v654 = vsub.f32 %v150, %v653
      %v655 = vand.u32 %v654, 4294901760
      %656 = vmatpush1.msra.mxu0 %v655
      %657 = vmatprep.subr.mxu0 0.0
      %v658 = vand.u32 %v149, 4294901760
      %v659 = vsub.f32 %v149, %v658
      %v660 = vand.u32 %v659, 4294901760
      %661 = vmatpush1.msra.mxu0 %v660
      %662 = vmatprep.subr.mxu0 0.0
      %v663 = vand.u32 %v148, 4294901760
      %v664 = vsub.f32 %v148, %v663
      %v665 = vand.u32 %v664, 4294901760
      %666 = vmatpush1.msra.mxu0 %v665
      %667 = vmatprep.subr.mxu0 0.0
      %v668 = vand.u32 %v147, 4294901760
      %v669 = vsub.f32 %v147, %v668
      %v670 = vand.u32 %v669, 4294901760
      %671 = vmatpush1.msra.mxu0 %v670
      %672 = vmatprep.subr.mxu0 0.0
      %v673 = vand.u32 %v146, 4294901760
      %v674 = vsub.f32 %v146, %v673
      %v675 = vand.u32 %v674, 4294901760
      %676 = vmatpush1.msra.mxu0 %v675
      %677 = vmatprep.subr.mxu0 0.0
      %678 = vmatpush2.msra.mxu0 0.0
      %679 = vmatprep.subr.mxu0 0.0
      %680 = vmatpush2.msra.mxu0 0.0
      %681 = vmatprep.subr.mxu0 0.0
      %682 = vmatpush2.msra.mxu0 0.0
      %683 = vmatprep.subr.mxu0 0.0
      %684 = vmatpush2.msra.mxu0 0.0
      %685 = vmatprep.subr.mxu0 0.0
      %686 = vmatpush2.msra.mxu0 0.0
      %687 = vmatprep.subr.mxu0 0.0
      %688 = vmatpush2.msra.mxu0 0.0
      %689 = vmatprep.subr.mxu0 0.0
      %690 = vmatpush2.msra.mxu0 0.0
      %691 = vmatprep.subr.mxu0 0.0
      %692 = vmatpush2.msra.mxu0 0.0
      %693 = vmatprep.subr.mxu0 0.0
      %694 = vmatpush2.msra.mxu0 0.0
      %695 = vmatprep.subr.mxu0 0.0
      %696 = vmatpush2.msra.mxu0 0.0
      %697 = vmatprep.subr.mxu0 0.0
      %698 = vmatpush2.msra.mxu0 0.0
      %699 = vmatprep.subr.mxu0 0.0
      %700 = vmatpush2.msra.mxu0 0.0
      %701 = vmatprep.subr.mxu0 0.0
      %702 = vmatpush2.msra.mxu0 0.0
      %703 = vmatprep.subr.mxu0 0.0
      %704 = vmatpush2.msra.mxu0 0.0
      %705 = vmatprep.subr.mxu0 0.0
      %706 = vmatpush2.msra.mxu0 0.0
      %707 = vmatprep.subr.mxu0 0.0
      %708 = vmatpush2.msra.mxu0 0.0
      %709 = vmatprep.mubr.f32.mxu0 0.0
      %v710 = vand.u32 %v145, 4294901760
      %711 = vmatmul.mubr.f32.gmra.mxu0 %v710
      %v712 = vpop.f32.mrf.mxu0
      %v713 = vadd.f32 %v594, %v712
      %v714 = vpop.f32.mrf.mxu0
      %715 = vdwg.mxu0
      %716 = vmatprep.subr.mxu0 0.0
      %v717 = vand.u32 %v161, 4294901760
      %718 = vmatpush1.msra.mxu0 %v717
      %719 = vmatprep.subr.mxu0 0.0
      %v720 = vand.u32 %v160, 4294901760
      %721 = vmatpush1.msra.mxu0 %v720
      %722 = vmatprep.subr.mxu0 0.0
      %v723 = vand.u32 %v159, 4294901760
      %724 = vmatpush1.msra.mxu0 %v723
      %725 = vmatprep.subr.mxu0 0.0
      %v726 = vand.u32 %v158, 4294901760
      %727 = vmatpush1.msra.mxu0 %v726
      %728 = vmatprep.subr.mxu0 0.0
      %v729 = vand.u32 %v157, 4294901760
      %730 = vmatpush1.msra.mxu0 %v729
      %731 = vmatprep.subr.mxu0 0.0
      %v732 = vand.u32 %v156, 4294901760
      %733 = vmatpush1.msra.mxu0 %v732
      %734 = vmatprep.subr.mxu0 0.0
      %v735 = vand.u32 %v155, 4294901760
      %736 = vmatpush1.msra.mxu0 %v735
      %737 = vmatprep.subr.mxu0 0.0
      %v738 = vand.u32 %v154, 4294901760
      %739 = vmatpush1.msra.mxu0 %v738
      %740 = vmatprep.subr.mxu0 0.0
      %v741 = vand.u32 %v153, 4294901760
      %742 = vmatpush1.msra.mxu0 %v741
      %743 = vmatprep.subr.mxu0 0.0
      %v744 = vand.u32 %v152, 4294901760
      %745 = vmatpush1.msra.mxu0 %v744
      %746 = vmatprep.subr.mxu0 0.0
      %v747 = vand.u32 %v151, 4294901760
      %748 = vmatpush1.msra.mxu0 %v747
      %749 = vmatprep.subr.mxu0 0.0
      %v750 = vand.u32 %v150, 4294901760
      %751 = vmatpush1.msra.mxu0 %v750
      %752 = vmatprep.subr.mxu0 0.0
      %v753 = vand.u32 %v149, 4294901760
      %754 = vmatpush1.msra.mxu0 %v753
      %755 = vmatprep.subr.mxu0 0.0
      %v756 = vand.u32 %v148, 4294901760
      %757 = vmatpush1.msra.mxu0 %v756
      %758 = vmatprep.subr.mxu0 0.0
      %v759 = vand.u32 %v147, 4294901760
      %760 = vmatpush1.msra.mxu0 %v759
      %761 = vmatprep.subr.mxu0 0.0
      %v762 = vand.u32 %v146, 4294901760
      %763 = vmatpush1.msra.mxu0 %v762
      %764 = vmatprep.subr.mxu0 0.0
      %765 = vmatpush2.msra.mxu0 0.0
      %766 = vmatprep.subr.mxu0 0.0
      %767 = vmatpush2.msra.mxu0 0.0
      %768 = vmatprep.subr.mxu0 0.0
      %769 = vmatpush2.msra.mxu0 0.0
      %770 = vmatprep.subr.mxu0 0.0
      %771 = vmatpush2.msra.mxu0 0.0
      %772 = vmatprep.subr.mxu0 0.0
      %773 = vmatpush2.msra.mxu0 0.0
      %774 = vmatprep.subr.mxu0 0.0
      %775 = vmatpush2.msra.mxu0 0.0
      %776 = vmatprep.subr.mxu0 0.0
      %777 = vmatpush2.msra.mxu0 0.0
      %778 = vmatprep.subr.mxu0 0.0
      %779 = vmatpush2.msra.mxu0 0.0
      %780 = vmatprep.subr.mxu0 0.0
      %781 = vmatpush2.msra.mxu0 0.0
      %782 = vmatprep.subr.mxu0 0.0
      %783 = vmatpush2.msra.mxu0 0.0
      %784 = vmatprep.subr.mxu0 0.0
      %785 = vmatpush2.msra.mxu0 0.0
      %786 = vmatprep.subr.mxu0 0.0
      %787 = vmatpush2.msra.mxu0 0.0
      %788 = vmatprep.subr.mxu0 0.0
      %789 = vmatpush2.msra.mxu0 0.0
      %790 = vmatprep.subr.mxu0 0.0
      %791 = vmatpush2.msra.mxu0 0.0
      %792 = vmatprep.subr.mxu0 0.0
      %793 = vmatpush2.msra.mxu0 0.0
      %794 = vmatprep.subr.mxu0 0.0
      %795 = vmatpush2.msra.mxu0 0.0
      %796 = vmatprep.mubr.f32.mxu0 0.0
      %v797 = vand.u32 %v145, 4294901760
      %798 = vmatmul.mubr.f32.gmra.mxu0 %v797
      %v799 = vpop.f32.mrf.mxu0
      %v800 = vadd.f32 %v713, %v799
      %v801 = vpop.f32.mrf.mxu0
      %802 = vdwg.mxu0
      %v803 = vmax.f32 %v800, 1.0
      %v804 = vlog2.pop %v803
      %v805 = vmul.f32 %v804, 0.6931472
      %v806 = vmul.f32 %v805, 0.20609929
      %v807 = vsub.f32 %v806, 1.0
      %808 = vst [vmem:[%s138] sm:$0xff] %v807
      %p809 = scmp.lt.s32.totalorder %s13, 1
      %s810 = scalar_select %p809, %s13, 1
      %s811 = smul.addr %s810, 8
      %s812 = scalar_lea.vmem %s2, %s811
      // Predicated region
      $region29: #{fn.1} parent=27 // pred_check
        %p813 = pneg %p78
      $region30: #{fn.1} parent=27 // pred_check_branch
        %815 = sbr.rel (%p813) target = $region32
      $region31: #{fn.1} parent=27 // pred_region
        _
      $region32: #{fn.1} parent=27 // pred_fallthru
        _
    $region28: #{fn.1} parent=5 // pred_fallthru
      _
    %p816 = scmp.le.s32.totalorder 2, %s8
    // Predicated region
    $region33: #{fn.1} parent=5 // pred_check
      %p817 = pneg %p816
    $region34: #{fn.1} parent=5 // pred_check_branch
      %819 = sbr.rel (%p817) target = $region36
    $region35: #{fn.1} parent=5 // pred_region
      %s820 = ssub.s32 %s8, 2
      // Predicated region
      $region37: #{fn.1} parent=35 // pred_check
        %p821 = pneg %p84
      $region38: #{fn.1} parent=35 // pred_check_branch
        %823 = sbr.rel (%p821) target = $region40
      $region39: #{fn.1} parent=35 // pred_region
        %p824 = scmp.lt.s32.totalorder %s14, 1
        %s825 = scalar_select %p824, %s14, 1
        %s826 = smul.addr %s825, 8
        %s827 = scalar_lea.vmem %s2, %s826
      $region40: #{fn.1} parent=35 // pred_fallthru
        _
    $region36: #{fn.1} parent=5 // pred_fallthru
      _
  $region6: #{fn.1} parent=0 // loop_footer
    %s12 = sadd.s32 1, %s8
  $region7: #{fn.1} parent=0 // loop_footer_branch
    %7 = sbr.rel target = $region3
  $region8: #{fn.1} parent=0 // loop_exit
    _

</llo_original>
